<compile_context>
chip_gen: v7x
topology: tpu7x:2x2x1
jax: 0.10.0
libtpu: 0.0.40
codegen_flags: <defaults>
</compile_context>

<pallas_src>
import functools

import jax
import jax.numpy as jnp
from jax.experimental import pallas as pl
from jax.experimental.pallas import tpu as pltpu


_LANE = 128
_BN_EPS = 1e-5


def _round_up(v, m):
    return ((v + m - 1) // m) * m


def _apply_act(y, act):
    if act == "ReLU":
        return jnp.maximum(y, 0.0)
    if act == "Tanh":
        return jnp.tanh(y)
    if act == "Sigmoid":
        # exp and approx reciprocal both issue on the EUP slot -> VPU stays free
        return pl.reciprocal(1.0 + jnp.exp(-y), approx=True)
    return y  # unknown / None -> identity (matches get_activation_fn)


# --------------------------------------------------------------------------
# kernel 1: fused Conv1d (+ bias) [+ activation  |  + BN partial statistics]
# --------------------------------------------------------------------------
def _conv_kernel(x_ref, w_ref, b_ref, o_ref, s_ref=None, ss_ref=None, *,
                 K, stride, L_out, L_pad, act, apply_bn):
    """x_ref : (1, C_in, L_in_pad)  one batch element (grid over N)
       w_ref : (C_out, K*C_in)      K taps folded into the contraction axis
       b_ref : (C_out, 1)
       o_ref : (1, C_out, L_pad)    lane-dense (L_pad multiple of 128)
       s_ref/ss_ref : (1, C_out, 1) per-batch partial sums (only when BN)
    """
    if stride == 1:
        cols = [x_ref[0, :, k:k + L_pad] for k in range(K)]
    else:
        # strided ref read; start k is a compile-time constant
        cols = [x_ref[0, :, pl.ds(k, L_pad, stride)] for k in range(K)]
    xcol = jnp.concatenate(cols, axis=0)                  # (K*C_in, L_pad)

    # single MXU matmul per batch element (contraction depth K*C_in)
    y = jnp.dot(w_ref[...], xcol, preferred_element_type=jnp.float32)
    y = y + b_ref[...]                                    # (C_out, 1) broadcast

    if apply_bn:
        # batch-stat BN needs global statistics: emit masked partial sums
        # here; normalization + activation happen in a second pass.
        mask = jax.lax.broadcasted_iota(jnp.int32, y.shape, 1) < L_out
        ym = jnp.where(mask, y, 0.0)
        s_ref[0, :, :] = jnp.sum(ym, axis=1, keepdims=True)
        ss_ref[0, :, :] = jnp.sum(ym * ym, axis=1, keepdims=True)
    else:
        y = _apply_act(y, act)

    o_ref[0, :, :] = y.astype(o_ref.dtype)                # single store


# --------------------------------------------------------------------------
# kernel 2: per-channel normalize (scale/shift) + activation
# --------------------------------------------------------------------------
def _bn_act_kernel(y_ref, scale_ref, shift_ref, o_ref, *, act):
    y = y_ref[0] * scale_ref[...] + shift_ref[...]
    o_ref[0, :, :] = _apply_act(y, act).astype(o_ref.dtype)


# --------------------------------------------------------------------------
# One CNN1D layer (wrapper / glue)
# --------------------------------------------------------------------------
def _conv1d_layer(x, weight, bias, *, stride, padding, apply_bn, act,
                  eps=_BN_EPS):
    """x: (N, C_in, L).  weight: (C_out, C_in, K).  Returns (N, C_out, L_out)."""
    N, C_in, L = x.shape
    C_out, _, K = weight.shape
    L_conv_in = L + 2 * padding
    L_out = (L_conv_in - K) // stride + 1
    L_pad = _round_up(L_out, _LANE)                       # lane-dense output
    L_in_pad = max(L_conv_in, (L_pad - 1) * stride + K)

    # conv padding + zero-fill up to the lane-dense input window
    x_p = jnp.pad(x.astype(jnp.float32),
                  ((0, 0), (0, 0), (padding, L_in_pad - L - padding)))
    # fold K taps into the contraction axis: w_packed[o, k*C_in + c] = w[o, c, k]
    w_packed = jnp.transpose(weight, (0, 2, 1)).reshape(C_out, K * C_in)
    w_packed = w_packed.astype(jnp.float32)
    b_packed = bias.reshape(C_out, 1).astype(jnp.float32)

    cp = pltpu.CompilerParams(dimension_semantics=("parallel",),
                              vmem_limit_bytes=32 * 1024 * 1024)

    conv_kernel = functools.partial(
        _conv_kernel, K=K, stride=stride, L_out=L_out, L_pad=L_pad,
        act=act, apply_bn=apply_bn)

    in_specs = [
        pl.BlockSpec((1, C_in, L_in_pad), lambda n: (n, 0, 0)),
        pl.BlockSpec((C_out, K * C_in), lambda n: (0, 0)),
        pl.BlockSpec((C_out, 1), lambda n: (0, 0)),
    ]
    y_spec = pl.BlockSpec((1, C_out, L_pad), lambda n: (n, 0, 0))
    stat_spec = pl.BlockSpec((1, C_out, 1), lambda n: (n, 0, 0))

    if apply_bn:
        y, s, ss = pl.pallas_call(
            conv_kernel,
            grid=(N,),
            out_shape=(jax.ShapeDtypeStruct((N, C_out, L_pad), jnp.float32),
                       jax.ShapeDtypeStruct((N, C_out, 1), jnp.float32),
                       jax.ShapeDtypeStruct((N, C_out, 1), jnp.float32)),
            in_specs=in_specs,
            out_specs=(y_spec, stat_spec, stat_spec),
            compiler_params=cp,
        )(x_p, w_packed, b_packed)

        # combine per-batch partial stats (tiny reduction, glue)
        cnt = float(N * L_out)
        mean = jnp.sum(s, axis=0) / cnt                    # (C_out, 1)
        var = jnp.sum(ss, axis=0) / cnt - mean * mean      # biased, as PyTorch
        scale = jax.lax.rsqrt(var + eps)
        shift = -mean * scale

        y = pl.pallas_call(
            functools.partial(_bn_act_kernel, act=act),
            grid=(N,),
            out_shape=jax.ShapeDtypeStruct((N, C_out, L_pad), jnp.float32),
            in_specs=[y_spec,
                      pl.BlockSpec((C_out, 1), lambda n: (0, 0)),
                      pl.BlockSpec((C_out, 1), lambda n: (0, 0))],
            out_specs=y_spec,
            compiler_params=cp,
        )(y, scale, shift)
    else:
        y = pl.pallas_call(
            conv_kernel,
            grid=(N,),
            out_shape=jax.ShapeDtypeStruct((N, C_out, L_pad), jnp.float32),
            in_specs=in_specs,
            out_specs=y_spec,
            compiler_params=cp,
        )(x_p, w_packed, b_packed)

    return y[:, :, :L_out]                                 # drop padded lanes


# --------------------------------------------------------------------------
# CNN1D wrapper (mirrors CNN1D.__init__ / build_model / forward)
# --------------------------------------------------------------------------
class PallasCNN1D:
    def __init__(self, kernel_size, unit_size, activation_fn, input_size,
                 num_layer, padding=None, stride=None, batch_norm=None,
                 bias=None, key=jax.random.PRNGKey(0)):
        self.input_size = input_size
        self.num_layer = num_layer
        self.kernel_size = kernel_size
        self.unit_size = unit_size
        self.activation_fn = activation_fn
        self.padding = padding or [0] * num_layer
        self.stride = stride or [1] * num_layer
        self.batch_norm = batch_norm or [False] * num_layer
        self.bias = bias or [True] * num_layer

        # deterministic parameter init (stand-in for nn.Conv1d init)
        self.params = []
        c_in = input_size
        for layer in range(num_layer):
            c_out = unit_size[layer]
            k = kernel_size[layer]
            key, wk, bk = jax.random.split(key, 3)
            fan_in = c_in * k
            bound = 1.0 / (fan_in ** 0.5)
            w = jax.random.uniform(wk, (c_out, c_in, k), jnp.float32,
                                   -bound, bound)
            if self.bias[layer]:
                b = jax.random.uniform(bk, (c_out,), jnp.float32,
                                       -bound, bound)
            else:
                b = jnp.zeros((c_out,), jnp.float32)
            self.params.append((w, b))
            c_in = c_out

    def forward(self, feature):
        assert isinstance(feature, list), "Class of feature must be List."
        x = feature[0]
        for layer in range(self.num_layer):
            w, b = self.params[layer]
            x = _conv1d_layer(
                x, w, b,
                stride=self.stride[layer],
                padding=self.padding[layer],
                apply_bn=self.batch_norm[layer],
                act=self.activation_fn[layer])
        return x


# --------------------------------------------------------------------------
# Pure-JAX reference (correctness check of the Pallas kernels)
# --------------------------------------------------------------------------
def _ref_forward(model, x):
    for layer in range(model.num_layer):
        w, b = model.params[layer]
        s, p = model.stride[layer], model.padding[layer]
        xp = jnp.pad(x, ((0, 0), (0, 0), (p, p)))
        C_out, _, K = w.shape
        L_out = (xp.shape[-1] - K) // s + 1
        out = jnp.zeros((x.shape[0], C_out, L_out), jnp.float32)
        for k in range(K):
            xs = xp[:, :, k:k + s * L_out:s]
            out = out + jnp.einsum('oc,ncl->nol', w[:, :, k], xs)
        out = out + b[None, :, None]
        if model.batch_norm[layer]:
            mean = jnp.mean(out, axis=(0, 2), keepdims=True)
            var = jnp.mean((out - mean) ** 2, axis=(0, 2), keepdims=True)
            out = (out - mean) * jax.lax.rsqrt(var + _BN_EPS)
        a = model.activation_fn[layer]
        if a == "ReLU":
            out = jnp.maximum(out, 0.0)
        elif a == "Tanh":
            out = jnp.tanh(out)
        elif a == "Sigmoid":
            out = jax.nn.sigmoid(out)
        x = out
    return x


if __name__ == "__main__":
    # NOTE: the original CNN2D.__init__ asserts `len(list) != num_layer`,
    # which is a bug in the reference code; we reproduce build_model/forward
    # semantics (sequential Conv1d -> BN -> activation), not the broken asserts.
    # TODO(synk): PyTorch source references nn.Conv1D / nn.Conv2D (typos for
    # nn.Conv1d / nn.Conv2d); intended Conv1d semantics are implemented here.
    model = PallasCNN1D(
        kernel_size=[3, 3],
        unit_size=[8, 16],
        activation_fn=["ReLU", "Tanh"],
        input_size=4,
        num_layer=2,
        padding=[1, 0],
        stride=[1, 1],
        batch_norm=[False, True],
        bias=[True, True],
        key=jax.random.PRNGKey(42),
    )

    key = jax.random.PRNGKey(0)
    x = jax.random.normal(key, (2, 4, 16), dtype=jnp.float32)  # (N, C, L)

    out = model.forward([x])
    out = jax.block_until_ready(out)

    ref = _ref_forward(model, x)
    assert out.shape == ref.shape, (out.shape, ref.shape)
    assert jnp.allclose(out, ref, rtol=1e-4, atol=1e-4), \
        float(jnp.max(jnp.abs(out - ref)))

    print("KERNEL_OK")
</pallas_src>

<mosaic_0001>
module attributes {stable_mosaic.version = 11 : i64} {
  func.func @_conv_kernel(%arg0: i32, %arg1: memref<1x4x130xf32, #tpu.memory_space<vmem>>, %arg2: memref<8x12xf32, #tpu.memory_space<vmem>>, %arg3: memref<8x1xf32, #tpu.memory_space<vmem>>, %arg4: memref<1x8x128xf32, #tpu.memory_space<vmem>>) attributes {dimension_semantics = [#tpu.dimension_semantics<parallel>], iteration_bounds = array<i64: 2>, scalar_prefetch = 0 : i64, scratch_operands = 0 : i64, tpu.core_type = #tpu.core_type<tc>, window_params = [{transform_indices = @transform_0, window_bounds = array<i64: 1, 4, 130>}, {pipeline_mode = #tpu.pipeline_mode<synchronous>, transform_indices = @transform_1, window_bounds = array<i64: 8, 12>}, {pipeline_mode = #tpu.pipeline_mode<synchronous>, transform_indices = @transform_2, window_bounds = array<i64: 8, 1>}, {transform_indices = @transform_3, window_bounds = array<i64: 1, 8, 128>}]} {
    %c0 = arith.constant 0 : index
    %c0_0 = arith.constant 0 : index
    %c0_1 = arith.constant 0 : index
    %0 = vector.load %arg1[%c0, %c0_0, %c0_1] : memref<1x4x130xf32, #tpu.memory_space<vmem>>, vector<1x4x128xf32>
    %1 = vector.shape_cast %0 : vector<1x4x128xf32> to vector<4x128xf32>
    %c0_2 = arith.constant 0 : index
    %c0_3 = arith.constant 0 : index
    %c1 = arith.constant 1 : index
    %2 = vector.load %arg1[%c0_2, %c0_3, %c1] : memref<1x4x130xf32, #tpu.memory_space<vmem>>, vector<1x4x128xf32>
    %3 = vector.shape_cast %2 : vector<1x4x128xf32> to vector<4x128xf32>
    %c0_4 = arith.constant 0 : index
    %c0_5 = arith.constant 0 : index
    %c2 = arith.constant 2 : index
    %4 = vector.load %arg1[%c0_4, %c0_5, %c2] : memref<1x4x130xf32, #tpu.memory_space<vmem>>, vector<1x4x128xf32>
    %5 = vector.shape_cast %4 : vector<1x4x128xf32> to vector<4x128xf32>
    %6 = tpu.concatenate %1, %3, %5 in 0 : vector<4x128xf32>, vector<4x128xf32>, vector<4x128xf32> -> vector<12x128xf32>
    %c0_6 = arith.constant 0 : index
    %c0_7 = arith.constant 0 : index
    %7 = vector.load %arg2[%c0_6, %c0_7] : memref<8x12xf32, #tpu.memory_space<vmem>>, vector<8x12xf32>
    %cst = arith.constant dense<0.000000e+00> : vector<8x128xf32>
    %8 = tpu.matmul %7, %6, %cst {dimension_numbers = #tpu.dot_dimension_numbers<[1], [0], [0], [1], [0, 0, 1, 1], [], []>} : vector<8x12xf32>, vector<12x128xf32>, vector<8x128xf32> -> vector<8x128xf32>
    %c0_8 = arith.constant 0 : index
    %c0_9 = arith.constant 0 : index
    %9 = vector.load %arg3[%c0_8, %c0_9] : memref<8x1xf32, #tpu.memory_space<vmem>>, vector<8x1xf32>
    %10 = vector.broadcast %9 : vector<8x1xf32> to vector<8x128xf32>
    %11 = arith.addf %8, %10 : vector<8x128xf32>
    %cst_10 = arith.constant 0.000000e+00 : f32
    %12 = vector.broadcast %cst_10 : f32 to vector<8x128xf32>
    %13 = arith.maximumf %11, %12 : vector<8x128xf32>
    %c0_11 = arith.constant 0 : index
    %c0_12 = arith.constant 0 : index
    %c0_13 = arith.constant 0 : index
    %14 = vector.load %arg4[%c0_11, %c0_12, %c0_13] : memref<1x8x128xf32, #tpu.memory_space<vmem>>, vector<1x8x128xf32>
    %15 = vector.shape_cast %14 : vector<1x8x128xf32> to vector<8x128xf32>
    %16 = vector.shape_cast %13 : vector<8x128xf32> to vector<1x8x128xf32>
    tpu.vector_store %arg4[%c0_11, %c0_12, %c0_13], %16 {strides = array<i32>} : memref<1x8x128xf32, #tpu.memory_space<vmem>>, vector<1x8x128xf32>,
    return
  }
  func.func @transform_0(%arg0: i32) -> (i32, i32, i32) {
    %c0_i32 = arith.constant 0 : i32
    %c0_i32_0 = arith.constant 0 : i32
    %c0_i32_1 = arith.constant 0 : i32
    return %arg0, %c0_i32, %c0_i32_0 : i32, i32, i32
  }
  func.func @transform_1(%arg0: i32) -> (i32, i32) {
    %c0_i32 = arith.constant 0 : i32
    %c0_i32_0 = arith.constant 0 : i32
    %c0_i32_1 = arith.constant 0 : i32
    return %c0_i32, %c0_i32_0 : i32, i32
  }
  func.func @transform_2(%arg0: i32) -> (i32, i32) {
    %c0_i32 = arith.constant 0 : i32
    %c0_i32_0 = arith.constant 0 : i32
    %c0_i32_1 = arith.constant 0 : i32
    return %c0_i32, %c0_i32_0 : i32, i32
  }
  func.func @transform_3(%arg0: i32) -> (i32, i32, i32) {
    %c0_i32 = arith.constant 0 : i32
    %c0_i32_0 = arith.constant 0 : i32
    %c0_i32_1 = arith.constant 0 : i32
    return %arg0, %c0_i32, %c0_i32_0 : i32, i32, i32
  }
}

</mosaic_0001>

<llo_original>
// kernel: tpu_custom_call.1
$region0: #{tpu_custom_call.1}
  #allocation0 [shape = 'u32[]', space=smem, size = 0x4, offset = 0x4, fixed_abs, tag = 'smem constant byte address 0x4 - core index']
  #allocation1 [shape = 'u32[144,128]{1,0:T(1,128)}', space=vmem, size = 0x12000, scoped, tag = 'internal scratch']
  %s0 = inlined_call_operand.hbm [shape: f32[2,4,130], index: 0, kind: input, shape index: {}]
  %s1 = inlined_call_operand.vmem [shape: f32[8,12], index: 1, kind: input, shape index: {}]
  %s2 = inlined_call_operand.vmem [shape: f32[8,1], index: 2, kind: input, shape index: {}]
  %s3 = inlined_call_operand.hbm [shape: f32[2,8,128], index: 3, kind: output, shape index: {}]
  %s4 = sld [smem:[#allocation0]]
  $region49: #{tpu_custom_call.1} parent=0
    _
  %s6 = ssub.s32 1, %s4
  %s7 = scalar_select 0, %s6, %s4
  $region1: #{tpu_custom_call.1} parent=0
    #allocation2 [shape = 'u8[8192]{0}', space=vmem, size = 0x2000, scoped, tag = 'input window, operand 0']
    #allocation3 [shape = 's32[2]{0}', space=sflag, size = 0x8, scoped, tag = 'scoped memory for tpu_custom_call.1']
    #allocation4 [shape = 's32[2]{0}', space=sflag, size = 0x8, scoped, tag = 'scoped memory for tpu_custom_call.1']
    #allocation5 [shape = 'u8[8192]{0}', space=vmem, size = 0x2000, scoped, tag = 'output window, operand 0']
    %8 = vsyncpa [#allocation3], 0
    %s9 = scalar_lea.sflag [#allocation3], 1
    %10 = vsyncpa %s9, 0
    %11 = vsyncpa [#allocation4], 0
    %s12 = scalar_lea.sflag [#allocation4], 1
    %13 = vsyncpa %s12, 0
    loop: start=0, step=1, limit=4
    $region2: #{tpu_custom_call.1} parent=1 // loop_pre_header
      _
    $region3: #{tpu_custom_call.1} parent=1 // loop_header
      %s15 = sphi 0, %s19
      %p16 = scmp.ge.s32.totalorder %s15, 4
      %s25 = sphi 0, %s27
      %s28 = sphi 0, %s25
      %s29 = sphi 0, %s28
      %s45 = sphi 0, %s29
      %s49 = sphi 0, %s49
      %s51 = sphi 0, %s49
      %s52 = sphi 0, %s51
      %s66 = sphi 0, %s52
      %s70 = sphi 0, %s70
      %s72 = sphi 0, %s70
      %s73 = sphi 0, %s72
      %s87 = sphi 0, %s73
      %s93 = sphi 0, %s95
      %s96 = sphi 0, %s93
      %s97 = sphi 0, %s96
      %s113 = sphi 0, %s97
    $region4: #{tpu_custom_call.1} parent=1 // loop_header_branch
      %18 = sbr.rel (%p16) target = $region8
    $region5: #{tpu_custom_call.1} parent=1 // loop_body
      %s20 = ssub.s32 %s15, 1
      %s21 = ssub.s32 %s15, 2
      %s22 = sadd.s32 %s15, 1
      %s23 = ssub.s32 %s15, %s22
      %p24 = scmp.eq.s32.totalorder %s23, 0
      %s26 = sadd.s32 %s25, 1
      %s27 = scalar_select %p24, %s25, %s26
      %p30 = pneg %p24
      %p31 = scmp.eq.s32.totalorder %s15, 1
      %p32 = por %p30, %p31
      %p33 = scmp.ne.s32.totalorder %s25, %s28
      %p34 = scmp.eq.s32.totalorder %s15, 0
      %p35 = por %p33, %p34
      %p36 = scmp.ne.s32.totalorder %s25, %s28
      %p37 = scmp.eq.s32.totalorder %s20, 1
      %p38 = por %p36, %p37
      %p39 = scmp.ne.s32.totalorder %s28, %s29
      %p40 = scmp.eq.s32.totalorder %s20, 0
      %p41 = por %p39, %p40
      %p42 = scmp.ne.s32.totalorder %s28, %s29
      %p43 = scmp.eq.s32.totalorder %s21, 1
      %p44 = por %p42, %p43
      %p46 = scmp.ne.s32.totalorder %s29, %s45
      %p47 = scmp.eq.s32.totalorder %s21, 0
      %p48 = por %p46, %p47
      %s50 = sadd.s32 %s49, 1
      %p53 = scmp.eq.s32.totalorder %s15, 1
      %p54 = scmp.ne.s32.totalorder %s49, %s51
      %p55 = scmp.eq.s32.totalorder %s15, 0
      %p56 = por %p54, %p55
      %p57 = scmp.ne.s32.totalorder %s49, %s51
      %p58 = scmp.eq.s32.totalorder %s20, 1
      %p59 = por %p57, %p58
      %p60 = scmp.ne.s32.totalorder %s51, %s52
      %p61 = scmp.eq.s32.totalorder %s20, 0
      %p62 = por %p60, %p61
      %p63 = scmp.ne.s32.totalorder %s51, %s52
      %p64 = scmp.eq.s32.totalorder %s21, 1
      %p65 = por %p63, %p64
      %p67 = scmp.ne.s32.totalorder %s52, %s66
      %p68 = scmp.eq.s32.totalorder %s21, 0
      %p69 = por %p67, %p68
      %s71 = sadd.s32 %s70, 1
      %p74 = scmp.eq.s32.totalorder %s15, 1
      %p75 = scmp.ne.s32.totalorder %s70, %s72
      %p76 = scmp.eq.s32.totalorder %s15, 0
      %p77 = por %p75, %p76
      %p78 = scmp.ne.s32.totalorder %s70, %s72
      %p79 = scmp.eq.s32.totalorder %s20, 1
      %p80 = por %p78, %p79
      %p81 = scmp.ne.s32.totalorder %s72, %s73
      %p82 = scmp.eq.s32.totalorder %s20, 0
      %p83 = por %p81, %p82
      %p84 = scmp.ne.s32.totalorder %s72, %s73
      %p85 = scmp.eq.s32.totalorder %s21, 1
      %p86 = por %p84, %p85
      %p88 = scmp.ne.s32.totalorder %s73, %s87
      %p89 = scmp.eq.s32.totalorder %s21, 0
      %p90 = por %p88, %p89
      %s91 = ssub.s32 %s15, %s22
      %p92 = scmp.eq.s32.totalorder %s91, 0
      %s94 = sadd.s32 %s93, 1
      %s95 = scalar_select %p92, %s93, %s94
      %p98 = pneg %p92
      %p99 = scmp.eq.s32.totalorder %s15, 1
      %p100 = por %p98, %p99
      %p101 = scmp.ne.s32.totalorder %s93, %s96
      %p102 = scmp.eq.s32.totalorder %s15, 0
      %p103 = por %p101, %p102
      %p104 = scmp.ne.s32.totalorder %s93, %s96
      %p105 = scmp.eq.s32.totalorder %s20, 1
      %p106 = por %p104, %p105
      %p107 = scmp.ne.s32.totalorder %s96, %s97
      %p108 = scmp.eq.s32.totalorder %s20, 0
      %p109 = por %p107, %p108
      %p110 = scmp.ne.s32.totalorder %s96, %s97
      %p111 = scmp.eq.s32.totalorder %s21, 1
      %p112 = por %p110, %p111
      %p114 = scmp.ne.s32.totalorder %s97, %s113
      %p115 = scmp.eq.s32.totalorder %s21, 0
      %p116 = por %p114, %p115
      %p117 = scmp.le.s32.totalorder 1, %s15
      %p118 = scmp.lt.s32.totalorder %s15, 3
      %p119 = pnand %p117, %p118
      %p120 = pneg %p119
      // Predicated region
      $region9: #{tpu_custom_call.1} parent=5 // pred_check
        _
      $region10: #{tpu_custom_call.1} parent=5 // pred_check_branch
        %122 = sbr.rel (%p119) target = $region12
      $region11: #{tpu_custom_call.1} parent=5 // pred_region
        %s123 = ssub.s32 %s15, 1
        // Predicated region
        $region13: #{tpu_custom_call.1} parent=11 // pred_check
          %p124 = pneg %p62
        $region14: #{tpu_custom_call.1} parent=11 // pred_check_branch
          %126 = sbr.rel (%p124) target = $region16
        $region15: #{tpu_custom_call.1} parent=11 // pred_region
          _
        $region16: #{tpu_custom_call.1} parent=11 // pred_fallthru
          _
        // Predicated region
        $region17: #{tpu_custom_call.1} parent=11 // pred_check
          %p127 = pneg %p83
        $region18: #{tpu_custom_call.1} parent=11 // pred_check_branch
          %129 = sbr.rel (%p127) target = $region20
        $region19: #{tpu_custom_call.1} parent=11 // pred_region
          _
        $region20: #{tpu_custom_call.1} parent=11 // pred_fallthru
          _
      $region12: #{tpu_custom_call.1} parent=5 // pred_fallthru
        _
      %p130 = scmp.lt.s32.totalorder %s15, 2
      // Predicated region
      $region21: #{tpu_custom_call.1} parent=5 // pred_check
        %p131 = pneg %p130
      $region22: #{tpu_custom_call.1} parent=5 // pred_check_branch
        %133 = sbr.rel (%p131) target = $region24
      $region23: #{tpu_custom_call.1} parent=5 // pred_region
        // Predicated region
        $region25: #{tpu_custom_call.1} parent=23 // pred_check
          %p134 = pneg %p35
        $region26: #{tpu_custom_call.1} parent=23 // pred_check_branch
          %136 = sbr.rel (%p134) target = $region28
        $region27: #{tpu_custom_call.1} parent=23 // pred_region
          %s137 = sand.u32 %s25, 1
          %s138 = scalar_lea.sflag [#allocation3], %s137
          %s139 = sand.u32 %s25, 1
          %s140 = smul.addr %s139, 8
          %s141 = scalar_lea.vmem [#allocation2], %s140
          %s143 = ssub.s32 128, 128
          %144 = vsyncadd %s138, %s143
          %s145 = smul.addr %s15, 2
          %s146 = smul.addr %s145, 64
          %s147 = scalar_lea.hbm %s0, %s146
          %s149 = sshll.u32 %s141, 4
          %s150 = int_to_ptr.vmem [resolvable:$true] %s149
          %152 = dma.hbm_to_vmem [thread:$0]  %s147, 128, %s150, %s138
        $region28: #{tpu_custom_call.1} parent=23 // pred_fallthru
          _
      $region24: #{tpu_custom_call.1} parent=5 // pred_fallthru
        _
      %p153 = scmp.le.s32.totalorder 1, %s15
      %p154 = scmp.lt.s32.totalorder %s15, 3
      %p155 = pnand %p153, %p154
      %p156 = pneg %p155
      // Predicated region
      $region29: #{tpu_custom_call.1} parent=5 // pred_check
        _
      $region30: #{tpu_custom_call.1} parent=5 // pred_check_branch
        %158 = sbr.rel (%p155) target = $region32
      $region31: #{tpu_custom_call.1} parent=5 // pred_region
        %s159 = ssub.s32 %s15, 1
        %s160 = sand.u32 %s28, 1
        %s161 = scalar_lea.sflag [#allocation3], %s160
        %s162 = sand.u32 %s28, 1
        %s163 = smul.addr %s162, 8
        %s164 = scalar_lea.vmem [#allocation2], %s163
        // Predicated region
        $region33: #{tpu_custom_call.1} parent=31 // pred_check
          %p165 = pneg %p41
        $region34: #{tpu_custom_call.1} parent=31 // pred_check_branch
          %167 = sbr.rel (%p165) target = $region36
        $region35: #{tpu_custom_call.1} parent=31 // pred_region
          %168 = dma.done %s161, 128
        $region36: #{tpu_custom_call.1} parent=31 // pred_fallthru
          _
        %s169 = sand.u32 %s28, 1
        %s170 = scalar_lea.sflag [#allocation3], %s169
        %s171 = sand.u32 %s28, 1
        %s172 = smul.addr %s171, 8
        %s173 = scalar_lea.vmem [#allocation2], %s172
        %p174 = pneg %p41
        %p175 = pneg %p38
        %p176 = pneg %p62
        %p177 = pneg %p59
        %p178 = pneg %p83
        %p179 = pneg %p80
        %p180 = pneg %p109
        %p181 = pneg %p106
        %s182 = sand.u32 %s96, 1
        %s183 = scalar_lea.sflag [#allocation4], %s182
        %s184 = sand.u32 %s96, 1
        %s185 = smul.addr %s184, 8
        %s186 = scalar_lea.vmem [#allocation5], %s185
        %v187 = vld [vmem:[%s164] sm:$0xf]
        %v188 = vld [vmem:[%s164] sm:$0xff]
        %v190 = vcombine.low %v188, %v188
        %191 = vrot.lane.b32.xlu0 %v190, 127
        %v192 = vpop.permute.xlu0 %191
        %193 = vrot.lane.b32.xlu0 %v188, 127
        %v194 = vpop.permute.xlu0 %193
        %vm195 = vcmask 1039360
        %v196 = vsel %vm195, %v192, %v194
        %v198 = vcombine.high %v188, %v188
        %199 = vrot.lane.b32.xlu0 %v188, 126
        %v200 = vpop.permute.xlu0 %199
        %201 = vrot.lane.b32.xlu0 %v198, 126
        %v202 = vpop.permute.xlu0 %201
        %vm203 = vcmask 1031168
        %v204 = vsel %vm203, %v200, %v202
        %vm205 = vcmask 1043456
        %v206 = vsel %vm205, %v187, %v196
        %v207 = vld [vmem:[%s1] sm:$0xff]
        %v208 = vld [vmem:[%s2] sm:$0xff]
        %210 = vset.pattern.permute.xlu0 0
        %211 = vperm.xlu0 %210, %v208
        %v212 = vpop.permute.xlu0 %211
        %vm214 = vcmask 97280
        %v216 = vsel %vm214, %v207, 0
        %v218 = vsel %vm205, %v204, 0
        %220 = vmatprep.subr.mxu0 0.0
        %221 = vmatpush1.msra.mxu0 %v206
        %222 = vmatprep.subr.mxu0 0.0
        %223 = vmatpush1.msra.mxu0 %v218
        %224 = vmatprep.subr.mxu0 0.0
        %225 = vmatpush1.msra.mxu0 0.0
        %226 = vmatprep.subr.mxu0 0.0
        %227 = vmatpush1.msra.mxu0 0.0
        %228 = vmatprep.subr.mxu0 0.0
        %229 = vmatpush1.msra.mxu0 0.0
        %230 = vmatprep.subr.mxu0 0.0
        %231 = vmatpush1.msra.mxu0 0.0
        %232 = vmatprep.subr.mxu0 0.0
        %233 = vmatpush1.msra.mxu0 0.0
        %234 = vmatprep.subr.mxu0 0.0
        %235 = vmatpush1.msra.mxu0 0.0
        %236 = vmatprep.subr.mxu0 0.0
        %237 = vmatpush1.msra.mxu0 0.0
        %238 = vmatprep.subr.mxu0 0.0
        %239 = vmatpush1.msra.mxu0 0.0
        %240 = vmatprep.subr.mxu0 0.0
        %241 = vmatpush1.msra.mxu0 0.0
        %242 = vmatprep.subr.mxu0 0.0
        %243 = vmatpush1.msra.mxu0 0.0
        %244 = vmatprep.subr.mxu0 0.0
        %245 = vmatpush1.msra.mxu0 0.0
        %246 = vmatprep.subr.mxu0 0.0
        %247 = vmatpush1.msra.mxu0 0.0
        %248 = vmatprep.subr.mxu0 0.0
        %249 = vmatpush1.msra.mxu0 0.0
        %250 = vmatprep.subr.mxu0 0.0
        %251 = vmatpush1.msra.mxu0 0.0
        %252 = vmatprep.subr.mxu0 0.0
        %253 = vmatpush1.msra.mxu0 0.0
        %254 = vmatprep.subr.mxu0 0.0
        %255 = vmatpush1.msra.mxu0 0.0
        %256 = vmatprep.subr.mxu0 0.0
        %257 = vmatpush1.msra.mxu0 0.0
        %258 = vmatprep.subr.mxu0 0.0
        %259 = vmatpush1.msra.mxu0 0.0
        %260 = vmatprep.subr.mxu0 0.0
        %261 = vmatpush1.msra.mxu0 0.0
        %262 = vmatprep.subr.mxu0 0.0
        %263 = vmatpush1.msra.mxu0 0.0
        %264 = vmatprep.subr.mxu0 0.0
        %265 = vmatpush1.msra.mxu0 0.0
        %266 = vmatprep.subr.mxu0 0.0
        %267 = vmatpush1.msra.mxu0 0.0
        %268 = vmatprep.subr.mxu0 0.0
        %269 = vmatpush1.msra.mxu0 0.0
        %270 = vmatprep.subr.mxu0 0.0
        %271 = vmatpush1.msra.mxu0 0.0
        %272 = vmatprep.subr.mxu0 0.0
        %273 = vmatpush1.msra.mxu0 0.0
        %274 = vmatprep.subr.mxu0 0.0
        %275 = vmatpush1.msra.mxu0 0.0
        %276 = vmatprep.subr.mxu0 0.0
        %277 = vmatpush1.msra.mxu0 0.0
        %278 = vmatprep.subr.mxu0 0.0
        %279 = vmatpush1.msra.mxu0 0.0
        %280 = vmatprep.subr.mxu0 0.0
        %281 = vmatpush1.msra.mxu0 0.0
        %282 = vmatprep.subr.mxu0 0.0
        %283 = vmatpush1.msra.mxu0 0.0
        %284 = vmatprep.mubr.f32.mxu0 0.0
        %285 = vmatmul.mubr.f32.gmra.mrb[0].mxu0 %v216
        %v286 = vpop.f32.mrb[0].mxu0
        %v287 = vadd.f32 %v212, %v286
        %v288 = vpop.f32.mrb[0].mxu0
        %289 = vdwg.mxu0
        %v290 = vmax.f32 %v287, 0.0
        %291 = vst [vmem:[%s186] sm:$0xff] %v290
        %s292 = sand.u32 %s96, 1
        %s293 = scalar_lea.sflag [#allocation4], %s292
        %s294 = sand.u32 %s96, 1
        %s295 = smul.addr %s294, 8
        %s296 = scalar_lea.vmem [#allocation5], %s295
        // Predicated region
        $region37: #{tpu_custom_call.1} parent=31 // pred_check
          %p297 = pneg %p106
        $region38: #{tpu_custom_call.1} parent=31 // pred_check_branch
          %299 = sbr.rel (%p297) target = $region40
        $region39: #{tpu_custom_call.1} parent=31 // pred_region
          %s301 = ssub.s32 128, 128
          %302 = vsyncadd %s293, %s301
          %s303 = smul.addr %s20, 128
          %s304 = scalar_lea.hbm %s3, %s303
          %s306 = sshll.u32 %s296, 4
          %s307 = int_to_ptr.vmem [resolvable:$true] %s306
          %309 = dma.vmem_to_hbm [thread:$0]  %s307, 128, %s304, %s293
        $region40: #{tpu_custom_call.1} parent=31 // pred_fallthru
          _
      $region32: #{tpu_custom_call.1} parent=5 // pred_fallthru
        _
      %p310 = scmp.le.s32.totalorder 2, %s15
      // Predicated region
      $region41: #{tpu_custom_call.1} parent=5 // pred_check
        %p311 = pneg %p310
      $region42: #{tpu_custom_call.1} parent=5 // pred_check_branch
        %313 = sbr.rel (%p311) target = $region44
      $region43: #{tpu_custom_call.1} parent=5 // pred_region
        %s314 = ssub.s32 %s15, 2
        // Predicated region
        $region45: #{tpu_custom_call.1} parent=43 // pred_check
          %p315 = pneg %p112
        $region46: #{tpu_custom_call.1} parent=43 // pred_check_branch
          %317 = sbr.rel (%p315) target = $region48
        $region47: #{tpu_custom_call.1} parent=43 // pred_region
          %s318 = sand.u32 %s97, 1
          %s319 = scalar_lea.sflag [#allocation4], %s318
          %s320 = sand.u32 %s97, 1
          %s321 = smul.addr %s320, 8
          %s322 = scalar_lea.vmem [#allocation5], %s321
          %323 = dma.done %s319, 128
        $region48: #{tpu_custom_call.1} parent=43 // pred_fallthru
          _
      $region44: #{tpu_custom_call.1} parent=5 // pred_fallthru
        _
    $region6: #{tpu_custom_call.1} parent=1 // loop_footer
      %s19 = sadd.s32 1, %s15
    $region7: #{tpu_custom_call.1} parent=1 // loop_footer_branch
      %14 = sbr.rel target = $region3
    $region8: #{tpu_custom_call.1} parent=1 // loop_exit
      _
    %324 = vsyncpa [#allocation3], 1
    %s325 = scalar_lea.sflag [#allocation3], 1
    %326 = vsyncpa %s325, 1
    %327 = vsyncpa [#allocation4], 1
    %s328 = scalar_lea.sflag [#allocation4], 1
    %329 = vsyncpa %s328, 1

</llo_original>
